<compile_context>
chip_gen: v6e
topology: v6e:2x2x1
jax: 0.10.0
libtpu: 0.0.40
codegen_flags: <defaults>
</compile_context>

<pallas_src>
import functools

import jax
import jax.numpy as jnp
from jax.experimental import pallas as pl
from jax.experimental.pallas import tpu as pltpu


def _round_up(v, m):
    return ((v + m - 1) // m) * m


def _fixed_vmem_bytes(s_pad, n_pad, b):
    return (2 * s_pad * n_pad * b["x"]            # x block, double-buffered
            + 2 * n_pad * 3 * n_pad * b["w"]      # fused QKV weights, double-buffered
            + 2 * s_pad * n_pad * b["scores"]     # Q, K scratch
            + s_pad * n_pad * b["mxu"])           # V scratch


def _per_tile_vmem_bytes(s_pad, n_pad, tq, b):
    return (2 * tq * n_pad * b["out"]             # out block, double-buffered
            + 2 * tq * s_pad * b["attn"]          # attn block, double-buffered
            + 4 * tq * s_pad * 4                  # live f32 scores/exp/attn + slack
            + s_pad * 3 * n_pad * 4)              # f32 qkv live during projection


def _pick_q_tile(s_pad, n_pad, b):
    """Largest q-tile (multiple of 128 dividing S_pad) fitting a ~48 MiB budget
    (v7x: 64 MiB physical VMEM minus headroom; v5e/v6e have 128 MiB)."""
    budget = 48 * 2 ** 20
    fixed = _fixed_vmem_bytes(s_pad, n_pad, b)
    candidates = [s_pad] + [t for t in (2048, 1024, 512, 256, 128)
                            if t < s_pad and s_pad % t == 0]
    for tq in candidates:
        if fixed + _per_tile_vmem_bytes(s_pad, n_pad, tq, b) <= budget:
            return tq
    return 128


def _make_kernel(seq_len, s_pad, n_pad, tq, mxu_dtype, scores_dtype):
    """Per-(batch, q-tile) kernel.  Scratch persists across grid steps, so the
    fused QKV projection runs once per batch instance (q_idx == 0)."""
    needs_mask = seq_len != s_pad

    def kernel(x_ref, wqkv_ref, out_ref, attn_ref, q_sc, k_sc, v_sc):
        qi = pl.program_id(1)

        # Fused QKV projection once per batch instance: bf16 MXU operands with
        # f32 accumulation by default; one weight-load sequence instead of 3.
        @pl.when(qi == 0)
        def _():
            x = x_ref[0].astype(mxu_dtype)              # (S_pad, N_pad)
            w = wqkv_ref[...].astype(mxu_dtype)         # (N_pad, 3*N_pad)
            qkv = jnp.dot(x, w, preferred_element_type=jnp.float32)
            # 128-aligned static slices -> free tile-aligned views.
            q_sc[...] = qkv[:, :n_pad].astype(q_sc.dtype)
            k_sc[...] = qkv[:, n_pad:2 * n_pad].astype(k_sc.dtype)
            v_sc[...] = qkv[:, 2 * n_pad:].astype(v_sc.dtype)

        row0 = pl.multiple_of(qi * tq, tq)
        q = q_sc[pl.ds(row0, tq), :]                    # (TQ, N_pad)

        # Q @ K^T with the transpose folded into the contraction (no XLU
        # transpose, no VMEM copy of k.T).  Kept in f32 by default: the module
        # has no 1/sqrt(d) scale, so the near one-hot attn map is sensitive.
        scores = jax.lax.dot_general(
            q, k_sc[...],
            dimension_numbers=(((1,), (1,)), ((), ())),
            preferred_element_type=jnp.float32)         # (TQ, S_pad)

        if needs_mask:
            # One-vreg-row mask of the padded key columns, broadcast over
            # query rows; only traced when S is not a multiple of 128.
            col = jax.lax.broadcasted_iota(jnp.int32, (1, s_pad), 1)
            scores = jnp.where(col < seq_len, scores, -jnp.inf)

        # Numerically stable softmax, strictly f32 (attn is an exact output of
        # the module, so use the exact reciprocal).
        m = jnp.max(scores, axis=-1, keepdims=True)
        e = jnp.exp(scores - m)
        denom = jnp.sum(e, axis=-1, keepdims=True)
        attn = e * pl.reciprocal(denom, approx=False)

        out = jnp.dot(attn.astype(mxu_dtype), v_sc[...],
                      preferred_element_type=jnp.float32)   # (TQ, N_pad)

        out_ref[0] = out.astype(out_ref.dtype)
        attn_ref[0] = attn.astype(attn_ref.dtype)

    return kernel


@functools.partial(jax.jit,
                   static_argnames=("mxu_dtype", "scores_dtype", "attn_dtype"))
def self_attention(x, w_q, w_k, w_v, *,
                   mxu_dtype=jnp.bfloat16,
                   scores_dtype=jnp.float32,
                   attn_dtype=jnp.float32):
    """SelfAttention forward (matches the PyTorch module: no 1/sqrt(d) scale).

    x: (S, N) or (B, S, N); w_*: (N, N).
    Returns (out, attn): out in x.dtype with x's batch shape, attn in attn_dtype.

    mxu_dtype:    operand dtype for the QKV projection and attn @ V (f32 acc).
    scores_dtype: operand dtype for Q @ K^T (default f32 -> exact attn map).
    attn_dtype:   storage dtype of the attn map (bf16 halves its HBM stream).
    """
    squeeze = x.ndim == 2
    if squeeze:
        x = x[None]
    B, S, N = x.shape

    # Pad to lane-dense, MXU-friendly tiles (last two dims multiples of 128).
    # Zero padding + key-column masking keeps the math identical.
    S_pad = _round_up(S, 128)
    N_pad = _round_up(N, 128)
    x_p = jnp.pad(x, ((0, 0), (0, S_pad - S), (0, N_pad - N)))
    pad_w = ((0, N_pad - N), (0, N_pad - N))
    # Fused QKV weight: one weight-load sequence; 3*N_pad output dim fills the
    # 256-wide MXU on v6e/v7x better than three N_pad matmuls.
    w_qkv = jnp.concatenate(
        [jnp.pad(w_q, pad_w), jnp.pad(w_k, pad_w), jnp.pad(w_v, pad_w)], axis=1)

    bytes_per = {
        "x": x.dtype.itemsize,
        "w": w_qkv.dtype.itemsize,
        "mxu": jnp.dtype(mxu_dtype).itemsize,
        "scores": jnp.dtype(scores_dtype).itemsize,
        "out": x.dtype.itemsize,
        "attn": jnp.dtype(attn_dtype).itemsize,
    }
    TQ = _pick_q_tile(S_pad, N_pad, bytes_per)
    num_q_tiles = S_pad // TQ

    vmem_est = (_fixed_vmem_bytes(S_pad, N_pad, bytes_per)
                + _per_tile_vmem_bytes(S_pad, N_pad, TQ, bytes_per))
    vmem_limit = int(min(max(1.25 * vmem_est, 16 * 2 ** 20), 64 * 2 ** 20))

    # TODO(synk): single-buffer the grid-invariant weight BlockSpec
    #   (pipeline_mode=pl.Buffered(1)) to save a weight buffer on v7x.
    # TODO(synk): for tiny S (the module's S=1..8 regime) pack several batch
    #   instances per grid step instead of padding S to 128.
    # TODO(synk): for B=1 on v7x, split the K/V precompute into its own call so
    #   the q-tile axis can be marked "parallel" across both TensorCores.
    out_p, attn_p = pl.pallas_call(
        _make_kernel(S, S_pad, N_pad, TQ, mxu_dtype, scores_dtype),
        grid=(B, num_q_tiles),
        in_specs=[
            pl.BlockSpec((1, S_pad, N_pad), lambda b, qi: (b, 0, 0)),
            pl.BlockSpec((N_pad, 3 * N_pad), lambda b, qi: (0, 0)),
        ],
        out_specs=(
            pl.BlockSpec((1, TQ, N_pad), lambda b, qi: (b, qi, 0)),
            pl.BlockSpec((1, TQ, S_pad), lambda b, qi: (b, qi, 0)),
        ),
        out_shape=(
            jax.ShapeDtypeStruct((B, S_pad, N_pad), x.dtype),
            jax.ShapeDtypeStruct((B, S_pad, S_pad), attn_dtype),
        ),
        scratch_shapes=[
            pltpu.VMEM((S_pad, N_pad), scores_dtype),   # Q (full instance)
            pltpu.VMEM((S_pad, N_pad), scores_dtype),   # K
            pltpu.VMEM((S_pad, N_pad), mxu_dtype),      # V
        ],
        compiler_params=pltpu.CompilerParams(
            dimension_semantics=("parallel", "arbitrary"),
            vmem_limit_bytes=vmem_limit),
    )(x_p, w_qkv)

    out = out_p[:, :S, :N]
    attn = attn_p[:, :S, :S]
    if squeeze:
        out, attn = out[0], attn[0]
    return out, attn


def self_attention_ref(x, w_q, w_k, w_v):
    q = x @ w_q
    k = x @ w_k
    v = x @ w_v
    scores = q @ jnp.swapaxes(k, -1, -2)
    attn = jax.nn.softmax(scores, axis=-1)
    return attn @ v, attn


if __name__ == "__main__":
    keys = jax.random.split(jax.random.PRNGKey(0), 8)

    # Batched small shapes (B=4, S=8, N=32).
    B, S, N = 4, 8, 32
    x = jax.random.normal(keys[0], (B, S, N), dtype=jnp.float32)
    w_q = jax.random.normal(keys[1], (N, N), dtype=jnp.float32)
    w_k = jax.random.normal(keys[2], (N, N), dtype=jnp.float32)
    w_v = jax.random.normal(keys[3], (N, N), dtype=jnp.float32)
    out_ref, attn_ref = self_attention_ref(x, w_q, w_k, w_v)

    # Exact f32 MXU path: numerically faithful to the PyTorch module.
    out, attn = jax.block_until_ready(
        self_attention(x, w_q, w_k, w_v, mxu_dtype=jnp.float32))
    assert out.shape == (B, S, N) and attn.shape == (B, S, S)
    assert jnp.allclose(out, out_ref, atol=1e-3, rtol=1e-3)
    assert jnp.allclose(attn, attn_ref, atol=1e-4, rtol=1e-4)

    # Unbatched (S, N) call, mirroring the module's forward on a 2-D input.
    out1, attn1 = jax.block_until_ready(
        self_attention(x[0], w_q, w_k, w_v, mxu_dtype=jnp.float32))
    assert out1.shape == (S, N) and attn1.shape == (S, S)
    assert jnp.allclose(out1, out_ref[0], atol=1e-3, rtol=1e-3)
    assert jnp.allclose(attn1, attn_ref[0], atol=1e-4, rtol=1e-4)

    # Default perf path: bf16 MXU operands (f32 accumulation) for the QKV
    # projection and attn@V, f32 Q@K^T + softmax.  The module's unscaled logits
    # give a near one-hot attention map that is too bf16-sensitive for a tight
    # elementwise check, so verify structure only.
    out_bf, attn_bf = jax.block_until_ready(self_attention(x, w_q, w_k, w_v))
    assert out_bf.shape == (B, S, N) and attn_bf.shape == (B, S, S)
    assert bool(jnp.all(jnp.isfinite(out_bf)))
    assert bool(jnp.all(jnp.isfinite(attn_bf)))
    assert jnp.allclose(attn_bf.sum(-1), 1.0, atol=1e-3)

    # The module's literal shape: x = randn(1, n) with n = 100 (single query).
    n_full = 100
    x2 = jax.random.normal(keys[4], (1, n_full), dtype=jnp.float32)
    wq2 = jax.random.normal(keys[5], (n_full, n_full), dtype=jnp.float32)
    wk2 = jax.random.normal(keys[6], (n_full, n_full), dtype=jnp.float32)
    wv2 = jax.random.normal(keys[7], (n_full, n_full), dtype=jnp.float32)
    out2, attn2 = jax.block_until_ready(
        self_attention(x2, wq2, wk2, wv2, mxu_dtype=jnp.float32))
    out2_ref, attn2_ref = self_attention_ref(x2, wq2, wk2, wv2)
    assert out2.shape == (1, n_full) and attn2.shape == (1, 1)
    assert jnp.allclose(out2, out2_ref, atol=1e-2, rtol=1e-3)
    assert jnp.allclose(attn2, attn2_ref, atol=1e-5)

    print("KERNEL_OK")
</pallas_src>

<mosaic_0001>
module attributes {stable_mosaic.version = 11 : i64} {
  func.func @kernel(%arg0: i32, %arg1: i32, %arg2: memref<1x128x128xf32, #tpu.memory_space<vmem>>, %arg3: memref<128x384xf32, #tpu.memory_space<vmem>>, %arg4: memref<1x128x128xf32, #tpu.memory_space<vmem>>, %arg5: memref<1x128x128xf32, #tpu.memory_space<vmem>>, %arg6: memref<128x128xf32, #tpu.memory_space<vmem>>, %arg7: memref<128x128xf32, #tpu.memory_space<vmem>>, %arg8: memref<128x128xf32, #tpu.memory_space<vmem>>) attributes {dimension_semantics = [#tpu.dimension_semantics<parallel>, #tpu.dimension_semantics<arbitrary>], iteration_bounds = array<i64: 4, 1>, scalar_prefetch = 0 : i64, scratch_operands = 3 : i64, tpu.core_type = #tpu.core_type<tc>, window_params = [{transform_indices = @transform_0, window_bounds = array<i64: 1, 128, 128>}, {pipeline_mode = #tpu.pipeline_mode<synchronous>, transform_indices = @transform_1, window_bounds = array<i64: 128, 384>}, {transform_indices = @transform_2, window_bounds = array<i64: 1, 128, 128>}, {transform_indices = @transform_3, window_bounds = array<i64: 1, 128, 128>}]} {
    %c0_i32 = arith.constant 0 : i32
    %0 = arith.cmpi eq, %arg1, %c0_i32 : i32
    %1 = arith.extui %0 : i1 to i32
    %c0_i32_0 = arith.constant 0 : i32
    %2 = arith.cmpi ne, %1, %c0_i32_0 : i32
    scf.if %2 {
      %c0_15 = arith.constant 0 : index
      %c0_16 = arith.constant 0 : index
      %c0_17 = arith.constant 0 : index
      %34 = vector.load %arg2[%c0_15, %c0_16, %c0_17] : memref<1x128x128xf32, #tpu.memory_space<vmem>>, vector<1x128x128xf32>
      %35 = vector.shape_cast %34 : vector<1x128x128xf32> to vector<128x128xf32>
      %c0_18 = arith.constant 0 : index
      %c0_19 = arith.constant 0 : index
      %36 = vector.load %arg3[%c0_18, %c0_19] : memref<128x384xf32, #tpu.memory_space<vmem>>, vector<128x384xf32>
      %cst_20 = arith.constant dense<0.000000e+00> : vector<128x384xf32>
      %37 = tpu.matmul %35, %36, %cst_20 {dimension_numbers = #tpu.dot_dimension_numbers<[1], [0], [0], [1], [0, 0, 1, 1], [], []>} : vector<128x128xf32>, vector<128x384xf32>, vector<128x384xf32> -> vector<128x384xf32>
      %38 = vector.extract_strided_slice %37 {offsets = [0, 0], sizes = [128, 128], strides = [1, 1]} : vector<128x384xf32> to vector<128x128xf32>
      %c0_21 = arith.constant 0 : index
      %c0_22 = arith.constant 0 : index
      %39 = vector.load %arg6[%c0_21, %c0_22] : memref<128x128xf32, #tpu.memory_space<vmem>>, vector<128x128xf32>
      tpu.vector_store %arg6[%c0_21, %c0_22], %38 {strides = array<i32>} : memref<128x128xf32, #tpu.memory_space<vmem>>, vector<128x128xf32>,
      %40 = vector.extract_strided_slice %37 {offsets = [0, 128], sizes = [128, 128], strides = [1, 1]} : vector<128x384xf32> to vector<128x128xf32>
      %c0_23 = arith.constant 0 : index
      %c0_24 = arith.constant 0 : index
      %41 = vector.load %arg7[%c0_23, %c0_24] : memref<128x128xf32, #tpu.memory_space<vmem>>, vector<128x128xf32>
      tpu.vector_store %arg7[%c0_23, %c0_24], %40 {strides = array<i32>} : memref<128x128xf32, #tpu.memory_space<vmem>>, vector<128x128xf32>,
      %42 = vector.extract_strided_slice %37 {offsets = [0, 256], sizes = [128, 128], strides = [1, 1]} : vector<128x384xf32> to vector<128x128xf32>
      %c0_25 = arith.constant 0 : index
      %c0_26 = arith.constant 0 : index
      %43 = vector.load %arg8[%c0_25, %c0_26] : memref<128x128xf32, #tpu.memory_space<vmem>>, vector<128x128xf32>
      tpu.vector_store %arg8[%c0_25, %c0_26], %42 {strides = array<i32>} : memref<128x128xf32, #tpu.memory_space<vmem>>, vector<128x128xf32>,
    } else {
    }
    %c128_i32 = arith.constant 128 : i32
    %3 = arith.muli %arg1, %c128_i32 : i32
    %4 = tpu.assume_multiple %3, 128 : i32
    %5 = arith.index_cast %4 : i32 to index
    %c0 = arith.constant 0 : index
    %6 = vector.load %arg6[%5, %c0] : memref<128x128xf32, #tpu.memory_space<vmem>>, vector<128x128xf32>
    %c0_1 = arith.constant 0 : index
    %c0_2 = arith.constant 0 : index
    %7 = vector.load %arg7[%c0_1, %c0_2] : memref<128x128xf32, #tpu.memory_space<vmem>>, vector<128x128xf32>
    %cst = arith.constant dense<0.000000e+00> : vector<128x128xf32>
    %8 = tpu.matmul %6, %7, %cst {dimension_numbers = #tpu.dot_dimension_numbers<[1], [1], [0], [0], [0, 0, 1, 0], [], []>} : vector<128x128xf32>, vector<128x128xf32>, vector<128x128xf32> -> vector<128x128xf32>
    %9 = tpu.iota {dimensions = array<i32: 1>} : vector<1x128xi32>
    %c8_i32 = arith.constant 8 : i32
    %10 = vector.broadcast %c8_i32 : i32 to vector<1x128xi32>
    %11 = arith.cmpi slt, %9, %10 : vector<1x128xi32>
    %cst_3 = arith.constant 0xFF800000 : f32
    %12 = vector.shape_cast %11 : vector<1x128xi1> to vector<1x128xi1>
    %13 = vector.broadcast %12 : vector<1x128xi1> to vector<128x128xi1>
    %14 = vector.broadcast %cst_3 : f32 to vector<128x128xf32>
    %15 = arith.select %13, %8, %14 : vector<128x128xi1>, vector<128x128xf32>
    %cst_4 = arith.constant dense<0xFF800000> : vector<128xf32>
    %16 = vector.multi_reduction <maximumf>, %15, %cst_4 [1] : vector<128x128xf32> to vector<128xf32>
    %17 = vector.shape_cast %16 : vector<128xf32> to vector<128x1xf32>
    %18 = vector.broadcast %17 : vector<128x1xf32> to vector<128x128xf32>
    %19 = arith.subf %15, %18 : vector<128x128xf32>
    %20 = math.exp %19 : vector<128x128xf32>
    %cst_5 = arith.constant dense<0.000000e+00> : vector<128xf32>
    %21 = vector.multi_reduction <add>, %20, %cst_5 [1] : vector<128x128xf32> to vector<128xf32>
    %22 = vector.shape_cast %21 : vector<128xf32> to vector<128x1xf32>
    %23 = tpu.reciprocal %22 : vector<128x1xf32> -> vector<128x1xf32>
    %24 = vector.broadcast %23 : vector<128x1xf32> to vector<128x128xf32>
    %25 = arith.mulf %20, %24 : vector<128x128xf32>
    %c0_6 = arith.constant 0 : index
    %c0_7 = arith.constant 0 : index
    %26 = vector.load %arg8[%c0_6, %c0_7] : memref<128x128xf32, #tpu.memory_space<vmem>>, vector<128x128xf32>
    %cst_8 = arith.constant dense<0.000000e+00> : vector<128x128xf32>
    %27 = tpu.matmul %25, %26, %cst_8 {dimension_numbers = #tpu.dot_dimension_numbers<[1], [0], [0], [1], [0, 0, 1, 1], [], []>} : vector<128x128xf32>, vector<128x128xf32>, vector<128x128xf32> -> vector<128x128xf32>
    %c0_9 = arith.constant 0 : index
    %c0_10 = arith.constant 0 : index
    %c0_11 = arith.constant 0 : index
    %28 = vector.load %arg4[%c0_9, %c0_10, %c0_11] : memref<1x128x128xf32, #tpu.memory_space<vmem>>, vector<1x128x128xf32>
    %29 = vector.shape_cast %28 : vector<1x128x128xf32> to vector<128x128xf32>
    %30 = vector.shape_cast %27 : vector<128x128xf32> to vector<1x128x128xf32>
    tpu.vector_store %arg4[%c0_9, %c0_10, %c0_11], %30 {strides = array<i32>} : memref<1x128x128xf32, #tpu.memory_space<vmem>>, vector<1x128x128xf32>,
    %c0_12 = arith.constant 0 : index
    %c0_13 = arith.constant 0 : index
    %c0_14 = arith.constant 0 : index
    %31 = vector.load %arg5[%c0_12, %c0_13, %c0_14] : memref<1x128x128xf32, #tpu.memory_space<vmem>>, vector<1x128x128xf32>
    %32 = vector.shape_cast %31 : vector<1x128x128xf32> to vector<128x128xf32>
    %33 = vector.shape_cast %25 : vector<128x128xf32> to vector<1x128x128xf32>
    tpu.vector_store %arg5[%c0_12, %c0_13, %c0_14], %33 {strides = array<i32>} : memref<1x128x128xf32, #tpu.memory_space<vmem>>, vector<1x128x128xf32>,
    return
  }
  func.func @transform_0(%arg0: i32, %arg1: i32) -> (i32, i32, i32) {
    %c0_i32 = arith.constant 0 : i32
    %c0_i32_0 = arith.constant 0 : i32
    %c0_i32_1 = arith.constant 0 : i32
    return %arg0, %c0_i32, %c0_i32_0 : i32, i32, i32
  }
  func.func @transform_1(%arg0: i32, %arg1: i32) -> (i32, i32) {
    %c0_i32 = arith.constant 0 : i32
    %c0_i32_0 = arith.constant 0 : i32
    %c0_i32_1 = arith.constant 0 : i32
    return %c0_i32, %c0_i32_0 : i32, i32
  }
  func.func @transform_2(%arg0: i32, %arg1: i32) -> (i32, i32, i32) {
    %c0_i32 = arith.constant 0 : i32
    %c0_i32_0 = arith.constant 0 : i32
    return %arg0, %arg1, %c0_i32 : i32, i32, i32
  }
  func.func @transform_3(%arg0: i32, %arg1: i32) -> (i32, i32, i32) {
    %c0_i32 = arith.constant 0 : i32
    %c0_i32_0 = arith.constant 0 : i32
    return %arg0, %arg1, %c0_i32 : i32, i32, i32
  }
}

</mosaic_0001>

<llo_original>
// kernel: self_attention.1
$region0: #{self_attention.1}
  #allocation0 [shape = 'u32[]', space=smem, size = 0x4, offset = 0x4, fixed_abs, tag = 'smem constant byte address 0x4 - core index']
  #allocation1 [shape = 'u32[144,128]{1,0:T(1,128)}', space=vmem, size = 0x12000, scoped, tag = 'internal scratch']
  #allocation2 [shape = 'f32[128,128]{1,0:T(8,128)}', space=vmem, size = 0x10000, scoped, tag = 'scratch operand']
  #allocation3 [shape = 'f32[128,128]{1,0:T(8,128)}', space=vmem, size = 0x10000, scoped, tag = 'scratch operand']
  #allocation4 [shape = 'f32[128,128]{1,0:T(8,128)}', space=vmem, size = 0x10000, scoped, tag = 'scratch operand']
  %s0 = inlined_call_operand.vmem [shape: f32[4,128,128], index: 0, kind: input, shape index: {}]
  %s1 = inlined_call_operand.vmem [shape: f32[128,384], index: 1, kind: input, shape index: {}]
  %s2 = inlined_call_operand.vmem [shape: f32[4,128,128], index: 2, kind: output, shape index: {0}]
  %s3 = inlined_call_operand.vmem [shape: f32[4,128,128], index: 3, kind: output, shape index: {1}]
  %4 = xla_tuple %s2, %s3
  %s5 = sld [smem:[#allocation0]]
  $region53: #{self_attention.1} parent=0
    _
  %s7 = ssub.s32 1, %s5
  %s8 = scalar_select 0, %s7, %s5
  loop: start=0, step=1, limit=6
  $region2: #{self_attention.1} parent=0 // loop_pre_header
    _
  $region3: #{self_attention.1} parent=0 // loop_header
    %s10 = sphi 0, %s14
    %p11 = scmp.ge.s32.totalorder %s10, 6
    %s17 = sphi 0, %s29
    %s18 = sphi 0, %s25
    %s19 = sphi 0, %s17
    %s20 = sphi 0, %s18
    %s21 = sphi 0, %s19
    %s22 = sphi 0, %s20
    %s32 = sphi 0, %s34
    %s35 = sphi 0, %s32
    %s36 = sphi 0, %s35
    %s52 = sphi 0, %s36
    %s56 = sphi 0, %s56
    %s58 = sphi 0, %s56
    %s59 = sphi 0, %s58
    %s73 = sphi 0, %s59
    %s81 = sphi 0, %s83
    %s84 = sphi 0, %s81
    %s85 = sphi 0, %s84
    %s101 = sphi 0, %s85
    %s109 = sphi 0, %s111
    %s112 = sphi 0, %s109
    %s113 = sphi 0, %s112
    %s129 = sphi 0, %s113
  $region4: #{self_attention.1} parent=0 // loop_header_branch
    %13 = sbr.rel (%p11) target = $region8
  $region5: #{self_attention.1} parent=0 // loop_body
    %s15 = ssub.s32 %s10, 1
    %s16 = ssub.s32 %s10, 2
    %s23 = sadd.s32 1, %s18
    %p24 = scmp.ge.s32.totalorder %s23, 1
    %s25 = scalar_select %p24, 0, %s23
    %s26 = sadd.s32 1, %s17
    %s27 = scalar_select %p24, %s26, %s17
    %p28 = scmp.ge.s32.totalorder %s27, 4
    %s29 = scalar_select %p28, 0, %s27
    %s30 = ssub.s32 %s17, %s29
    %p31 = scmp.eq.s32.totalorder %s30, 0
    %s33 = sadd.s32 %s32, 1
    %s34 = scalar_select %p31, %s32, %s33
    %p37 = pneg %p31
    %p38 = scmp.eq.s32.totalorder %s10, 3
    %p39 = por %p37, %p38
    %p40 = scmp.ne.s32.totalorder %s32, %s35
    %p41 = scmp.eq.s32.totalorder %s10, 0
    %p42 = por %p40, %p41
    %p43 = scmp.ne.s32.totalorder %s32, %s35
    %p44 = scmp.eq.s32.totalorder %s15, 3
    %p45 = por %p43, %p44
    %p46 = scmp.ne.s32.totalorder %s35, %s36
    %p47 = scmp.eq.s32.totalorder %s15, 0
    %p48 = por %p46, %p47
    %p49 = scmp.ne.s32.totalorder %s35, %s36
    %p50 = scmp.eq.s32.totalorder %s16, 3
    %p51 = por %p49, %p50
    %p53 = scmp.ne.s32.totalorder %s36, %s52
    %p54 = scmp.eq.s32.totalorder %s16, 0
    %p55 = por %p53, %p54
    %s57 = sadd.s32 %s56, 1
    %p60 = scmp.eq.s32.totalorder %s10, 3
    %p61 = scmp.ne.s32.totalorder %s56, %s58
    %p62 = scmp.eq.s32.totalorder %s10, 0
    %p63 = por %p61, %p62
    %p64 = scmp.ne.s32.totalorder %s56, %s58
    %p65 = scmp.eq.s32.totalorder %s15, 3
    %p66 = por %p64, %p65
    %p67 = scmp.ne.s32.totalorder %s58, %s59
    %p68 = scmp.eq.s32.totalorder %s15, 0
    %p69 = por %p67, %p68
    %p70 = scmp.ne.s32.totalorder %s58, %s59
    %p71 = scmp.eq.s32.totalorder %s16, 3
    %p72 = por %p70, %p71
    %p74 = scmp.ne.s32.totalorder %s59, %s73
    %p75 = scmp.eq.s32.totalorder %s16, 0
    %p76 = por %p74, %p75
    %s77 = ssub.s32 %s17, %s29
    %s78 = ssub.s32 %s18, %s25
    %s79 = sor.u32 %s77, %s78
    %p80 = scmp.eq.s32.totalorder %s79, 0
    %s82 = sadd.s32 %s81, 1
    %s83 = scalar_select %p80, %s81, %s82
    %p86 = pneg %p80
    %p87 = scmp.eq.s32.totalorder %s10, 3
    %p88 = por %p86, %p87
    %p89 = scmp.ne.s32.totalorder %s81, %s84
    %p90 = scmp.eq.s32.totalorder %s10, 0
    %p91 = por %p89, %p90
    %p92 = scmp.ne.s32.totalorder %s81, %s84
    %p93 = scmp.eq.s32.totalorder %s15, 3
    %p94 = por %p92, %p93
    %p95 = scmp.ne.s32.totalorder %s84, %s85
    %p96 = scmp.eq.s32.totalorder %s15, 0
    %p97 = por %p95, %p96
    %p98 = scmp.ne.s32.totalorder %s84, %s85
    %p99 = scmp.eq.s32.totalorder %s16, 3
    %p100 = por %p98, %p99
    %p102 = scmp.ne.s32.totalorder %s85, %s101
    %p103 = scmp.eq.s32.totalorder %s16, 0
    %p104 = por %p102, %p103
    %s105 = ssub.s32 %s17, %s29
    %s106 = ssub.s32 %s18, %s25
    %s107 = sor.u32 %s105, %s106
    %p108 = scmp.eq.s32.totalorder %s107, 0
    %s110 = sadd.s32 %s109, 1
    %s111 = scalar_select %p108, %s109, %s110
    %p114 = pneg %p108
    %p115 = scmp.eq.s32.totalorder %s10, 3
    %p116 = por %p114, %p115
    %p117 = scmp.ne.s32.totalorder %s109, %s112
    %p118 = scmp.eq.s32.totalorder %s10, 0
    %p119 = por %p117, %p118
    %p120 = scmp.ne.s32.totalorder %s109, %s112
    %p121 = scmp.eq.s32.totalorder %s15, 3
    %p122 = por %p120, %p121
    %p123 = scmp.ne.s32.totalorder %s112, %s113
    %p124 = scmp.eq.s32.totalorder %s15, 0
    %p125 = por %p123, %p124
    %p126 = scmp.ne.s32.totalorder %s112, %s113
    %p127 = scmp.eq.s32.totalorder %s16, 3
    %p128 = por %p126, %p127
    %p130 = scmp.ne.s32.totalorder %s113, %s129
    %p131 = scmp.eq.s32.totalorder %s16, 0
    %p132 = por %p130, %p131
    %p133 = scmp.le.s32.totalorder 1, %s10
    %p134 = scmp.lt.s32.totalorder %s10, 5
    %p135 = pnand %p133, %p134
    %p136 = pneg %p135
    // Predicated region
    $region9: #{self_attention.1} parent=5 // pred_check
      _
    $region10: #{self_attention.1} parent=5 // pred_check_branch
      %138 = sbr.rel (%p135) target = $region12
    $region11: #{self_attention.1} parent=5 // pred_region
      %s139 = ssub.s32 %s10, 1
      // Predicated region
      $region13: #{self_attention.1} parent=11 // pred_check
        %p140 = pneg %p69
      $region14: #{self_attention.1} parent=11 // pred_check_branch
        %142 = sbr.rel (%p140) target = $region16
      $region15: #{self_attention.1} parent=11 // pred_region
        _
      $region16: #{self_attention.1} parent=11 // pred_fallthru
        _
    $region12: #{self_attention.1} parent=5 // pred_fallthru
      _
    %p143 = scmp.lt.s32.totalorder %s10, 4
    // Predicated region
    $region17: #{self_attention.1} parent=5 // pred_check
      %p144 = pneg %p143
    $region18: #{self_attention.1} parent=5 // pred_check_branch
      %146 = sbr.rel (%p144) target = $region20
    $region19: #{self_attention.1} parent=5 // pred_region
      // Predicated region
      $region21: #{self_attention.1} parent=19 // pred_check
        %p147 = pneg %p42
      $region22: #{self_attention.1} parent=19 // pred_check_branch
        %149 = sbr.rel (%p147) target = $region24
      $region23: #{self_attention.1} parent=19 // pred_region
        %p150 = scmp.lt.s32.totalorder %s17, 3
        %s151 = scalar_select %p150, %s17, 3
        %s152 = smul.addr %s151, 16
        %s153 = smul.addr %s152, 8
        %s154 = scalar_lea.vmem %s0, %s153
      $region24: #{self_attention.1} parent=19 // pred_fallthru
        _
    $region20: #{self_attention.1} parent=5 // pred_fallthru
      _
    %p155 = scmp.le.s32.totalorder 1, %s10
    %p156 = scmp.lt.s32.totalorder %s10, 5
    %p157 = pnand %p155, %p156
    %p158 = pneg %p157
    // Predicated region
    $region25: #{self_attention.1} parent=5 // pred_check
      _
    $region26: #{self_attention.1} parent=5 // pred_check_branch
      %160 = sbr.rel (%p157) target = $region28
    $region27: #{self_attention.1} parent=5 // pred_region
      %s161 = ssub.s32 %s10, 1
      %p162 = scmp.lt.s32.totalorder %s19, 3
      %s163 = scalar_select %p162, %s19, 3
      %s164 = smul.addr %s163, 16
      %s165 = smul.addr %s164, 8
      %s166 = scalar_lea.vmem %s0, %s165
      %p167 = pneg %p48
      %p168 = pneg %p45
      %p169 = pneg %p69
      %p170 = pneg %p66
      %p171 = pneg %p97
      %p172 = pneg %p94
      %s173 = smul.u32 16, %s20
      %p174 = scmp.lt.s32.totalorder %s19, 3
      %s175 = scalar_select %p174, %s19, 3
      %p176 = scmp.lt.s32.totalorder %s173, 15
      %s177 = scalar_select %p176, %s173, 15
      %s178 = smul.addr %s175, 16
      %s179 = sadd.s32 %s177, %s178
      %s180 = smul.addr %s179, 8
      %s181 = scalar_lea.vmem %s2, %s180
      %p182 = pneg %p125
      %p183 = pneg %p122
      %s184 = smul.u32 16, %s20
      %p185 = scmp.lt.s32.totalorder %s19, 3
      %s186 = scalar_select %p185, %s19, 3
      %p187 = scmp.lt.s32.totalorder %s184, 15
      %s188 = scalar_select %p187, %s184, 15
      %s189 = smul.addr %s186, 16
      %s190 = sadd.s32 %s188, %s189
      %s191 = smul.addr %s190, 8
      %s192 = scalar_lea.vmem %s3, %s191
      %p193 = scmp.lt.s32.totalorder %s19, 3
      %s194 = scalar_select %p193, %s19, 3
      %s195 = smul.addr %s194, 16
      %s196 = smul.addr %s195, 8
      %s197 = scalar_lea.vmem %s0, %s196
      %s198 = smul.u32 16, %s20
      %p199 = scmp.lt.s32.totalorder %s19, 3
      %s200 = scalar_select %p199, %s19, 3
      %p201 = scmp.lt.s32.totalorder %s198, 15
      %s202 = scalar_select %p201, %s198, 15
      %s203 = smul.addr %s200, 16
      %s204 = sadd.s32 %s202, %s203
      %s205 = smul.addr %s204, 8
      %s206 = scalar_lea.vmem %s2, %s205
      %s207 = smul.u32 16, %s20
      %s208 = smul.u32 16, %s20
      %p209 = scmp.lt.s32.totalorder %s19, 3
      %s210 = scalar_select %p209, %s19, 3
      %p211 = scmp.lt.s32.totalorder %s208, 15
      %s212 = scalar_select %p211, %s208, 15
      %s213 = smul.addr %s210, 16
      %s214 = sadd.s32 %s212, %s213
      %s215 = smul.addr %s214, 8
      %s216 = scalar_lea.vmem %s3, %s215
      %s217 = smul.u32 16, %s20
      %p218 = scmp.eq.s32.totalorder %s20, 0
      // Predicated region
      $region29: #{self_attention.1} parent=27 // pred_check
        %p219 = pneg %p218
      $region30: #{self_attention.1} parent=27 // pred_check_branch
        %221 = sbr.rel (%p219) target = $region32
      $region31: #{self_attention.1} parent=27 // pred_region
        %v222 = vld [vmem:[%s197] sm:$0xff]
        %v223 = vld [vmem:[%s197 + $0x8] sm:$0xff]
        %v224 = vld [vmem:[%s197 + $0x10] sm:$0xff]
        %v225 = vld [vmem:[%s197 + $0x18] sm:$0xff]
        %v226 = vld [vmem:[%s197 + $0x20] sm:$0xff]
        %v227 = vld [vmem:[%s197 + $0x28] sm:$0xff]
        %v228 = vld [vmem:[%s197 + $0x30] sm:$0xff]
        %v229 = vld [vmem:[%s197 + $0x38] sm:$0xff]
        %v230 = vld [vmem:[%s197 + $0x40] sm:$0xff]
        %v231 = vld [vmem:[%s197 + $0x48] sm:$0xff]
        %v232 = vld [vmem:[%s197 + $0x50] sm:$0xff]
        %v233 = vld [vmem:[%s197 + $0x58] sm:$0xff]
        %v234 = vld [vmem:[%s197 + $0x60] sm:$0xff]
        %v235 = vld [vmem:[%s197 + $0x68] sm:$0xff]
        %v236 = vld [vmem:[%s197 + $0x70] sm:$0xff]
        %v237 = vld [vmem:[%s197 + $0x78] sm:$0xff]
        %v238 = vld [vmem:[%s1] sm:$0xff]
        %v239 = vld [vmem:[%s1 + $0x8] sm:$0xff]
        %v240 = vld [vmem:[%s1 + $0x10] sm:$0xff]
        %v241 = vld [vmem:[%s1 + $0x18] sm:$0xff]
        %v242 = vld [vmem:[%s1 + $0x20] sm:$0xff]
        %v243 = vld [vmem:[%s1 + $0x28] sm:$0xff]
        %v244 = vld [vmem:[%s1 + $0x30] sm:$0xff]
        %v245 = vld [vmem:[%s1 + $0x38] sm:$0xff]
        %v246 = vld [vmem:[%s1 + $0x40] sm:$0xff]
        %v247 = vld [vmem:[%s1 + $0x48] sm:$0xff]
        %v248 = vld [vmem:[%s1 + $0x50] sm:$0xff]
        %v249 = vld [vmem:[%s1 + $0x58] sm:$0xff]
        %v250 = vld [vmem:[%s1 + $0x60] sm:$0xff]
        %v251 = vld [vmem:[%s1 + $0x68] sm:$0xff]
        %v252 = vld [vmem:[%s1 + $0x70] sm:$0xff]
        %v253 = vld [vmem:[%s1 + $0x78] sm:$0xff]
        %v254 = vld [vmem:[%s1 + $0x80] sm:$0xff]
        %v255 = vld [vmem:[%s1 + $0x88] sm:$0xff]
        %v256 = vld [vmem:[%s1 + $0x90] sm:$0xff]
        %v257 = vld [vmem:[%s1 + $0x98] sm:$0xff]
        %v258 = vld [vmem:[%s1 + $0xa0] sm:$0xff]
        %v259 = vld [vmem:[%s1 + $0xa8] sm:$0xff]
        %v260 = vld [vmem:[%s1 + $0xb0] sm:$0xff]
        %v261 = vld [vmem:[%s1 + $0xb8] sm:$0xff]
        %v262 = vld [vmem:[%s1 + $0xc0] sm:$0xff]
        %v263 = vld [vmem:[%s1 + $0xc8] sm:$0xff]
        %v264 = vld [vmem:[%s1 + $0xd0] sm:$0xff]
        %v265 = vld [vmem:[%s1 + $0xd8] sm:$0xff]
        %v266 = vld [vmem:[%s1 + $0xe0] sm:$0xff]
        %v267 = vld [vmem:[%s1 + $0xe8] sm:$0xff]
        %v268 = vld [vmem:[%s1 + $0xf0] sm:$0xff]
        %v269 = vld [vmem:[%s1 + $0xf8] sm:$0xff]
        %v270 = vld [vmem:[%s1 + $0x100] sm:$0xff]
        %v271 = vld [vmem:[%s1 + $0x108] sm:$0xff]
        %v272 = vld [vmem:[%s1 + $0x110] sm:$0xff]
        %v273 = vld [vmem:[%s1 + $0x118] sm:$0xff]
        %v274 = vld [vmem:[%s1 + $0x120] sm:$0xff]
        %v275 = vld [vmem:[%s1 + $0x128] sm:$0xff]
        %v276 = vld [vmem:[%s1 + $0x130] sm:$0xff]
        %v277 = vld [vmem:[%s1 + $0x138] sm:$0xff]
        %v278 = vld [vmem:[%s1 + $0x140] sm:$0xff]
        %v279 = vld [vmem:[%s1 + $0x148] sm:$0xff]
        %v280 = vld [vmem:[%s1 + $0x150] sm:$0xff]
        %v281 = vld [vmem:[%s1 + $0x158] sm:$0xff]
        %v282 = vld [vmem:[%s1 + $0x160] sm:$0xff]
        %v283 = vld [vmem:[%s1 + $0x168] sm:$0xff]
        %v284 = vld [vmem:[%s1 + $0x170] sm:$0xff]
        %v285 = vld [vmem:[%s1 + $0x178] sm:$0xff]
        %286 = vmatprep.subr.mxu0 %v284
        %287 = vmatpush1.msra.mxu0 %v283
        %288 = vmatprep.subr.mxu0 %v281
        %289 = vmatpush1.msra.mxu0 %v280
        %290 = vmatprep.subr.mxu0 %v278
        %291 = vmatpush1.msra.mxu0 %v277
        %292 = vmatprep.subr.mxu0 %v275
        %293 = vmatpush1.msra.mxu0 %v274
        %294 = vmatprep.subr.mxu0 %v272
        %295 = vmatpush1.msra.mxu0 %v271
        %296 = vmatprep.subr.mxu0 %v269
        %297 = vmatpush1.msra.mxu0 %v268
        %298 = vmatprep.subr.mxu0 %v266
        %299 = vmatpush1.msra.mxu0 %v265
        %300 = vmatprep.subr.mxu0 %v263
        %301 = vmatpush1.msra.mxu0 %v262
        %302 = vmatprep.subr.mxu0 %v260
        %303 = vmatpush1.msra.mxu0 %v259
        %304 = vmatprep.subr.mxu0 %v257
        %305 = vmatpush1.msra.mxu0 %v256
        %306 = vmatprep.subr.mxu0 %v254
        %307 = vmatpush1.msra.mxu0 %v253
        %308 = vmatprep.subr.mxu0 %v251
        %309 = vmatpush1.msra.mxu0 %v250
        %310 = vmatprep.subr.mxu0 %v248
        %311 = vmatpush1.msra.mxu0 %v247
        %312 = vmatprep.subr.mxu0 %v245
        %313 = vmatpush1.msra.mxu0 %v244
        %314 = vmatprep.subr.mxu0 %v242
        %315 = vmatpush1.msra.mxu0 %v241
        %316 = vmatprep.subr.mxu0 %v239
        %317 = vmatpush1.msra.mxu0 %v238
        %318 = vmatprep.subr.mxu0 0.0
        %319 = vmatpush2.msra.mxu0 0.0
        %320 = vmatprep.subr.mxu0 0.0
        %321 = vmatpush2.msra.mxu0 0.0
        %322 = vmatprep.subr.mxu0 0.0
        %323 = vmatpush2.msra.mxu0 0.0
        %324 = vmatprep.subr.mxu0 0.0
        %325 = vmatpush2.msra.mxu0 0.0
        %326 = vmatprep.subr.mxu0 0.0
        %327 = vmatpush2.msra.mxu0 0.0
        %328 = vmatprep.subr.mxu0 0.0
        %329 = vmatpush2.msra.mxu0 0.0
        %330 = vmatprep.subr.mxu0 0.0
        %331 = vmatpush2.msra.mxu0 0.0
        %332 = vmatprep.subr.mxu0 0.0
        %333 = vmatpush2.msra.mxu0 0.0
        %334 = vmatprep.subr.mxu0 0.0
        %335 = vmatpush2.msra.mxu0 0.0
        %336 = vmatprep.subr.mxu0 0.0
        %337 = vmatpush2.msra.mxu0 0.0
        %338 = vmatprep.subr.mxu0 0.0
        %339 = vmatpush2.msra.mxu0 0.0
        %340 = vmatprep.subr.mxu0 0.0
        %341 = vmatpush2.msra.mxu0 0.0
        %342 = vmatprep.subr.mxu0 0.0
        %343 = vmatpush2.msra.mxu0 0.0
        %344 = vmatprep.subr.mxu0 0.0
        %345 = vmatpush2.msra.mxu0 0.0
        %346 = vmatprep.subr.mxu0 0.0
        %347 = vmatpush2.msra.mxu0 0.0
        %348 = vmatprep.subr.mxu0 0.0
        %349 = vmatpush2.msra.mxu0 0.0
        %350 = vmatprep.mubr.f32.mxu0 0.0
        %351 = vmatmul.mubr.f32.gmra.mxu0 %v222
        %v352 = vpop.f32.mrf.mxu0
        %v353 = vadd.f32 0.0, %v352
        %v354 = vpop.f32.mrf.mxu0
        %v355 = vadd.f32 0.0, %v354
        %356 = vmatprep.mubr.f32.mxu0 0.0
        %357 = vmatmul.mubr.f32.gmra.mxu0 %v223
        %v358 = vpop.f32.mrf.mxu0
        %v359 = vadd.f32 0.0, %v358
        %v360 = vpop.f32.mrf.mxu0
        %v361 = vadd.f32 0.0, %v360
        %362 = vmatprep.mubr.f32.mxu0 0.0
        %363 = vmatmul.mubr.f32.gmra.mxu0 %v224
        %v364 = vpop.f32.mrf.mxu0
        %v365 = vadd.f32 0.0, %v364
        %v366 = vpop.f32.mrf.mxu0
        %v367 = vadd.f32 0.0, %v366
        %368 = vmatprep.mubr.f32.mxu0 0.0
        %369 = vmatmul.mubr.f32.gmra.mxu0 %v225
        %v370 = vpop.f32.mrf.mxu0
        %v371 = vadd.f32 0.0, %v370
        %v372 = vpop.f32.mrf.mxu0
        %v373 = vadd.f32 0.0, %v372
        %374 = vmatprep.mubr.f32.mxu0 0.0
        %375 = vmatmul.mubr.f32.gmra.mxu0 %v226
        %v376 = vpop.f32.mrf.mxu0
        %v377 = vadd.f32 0.0, %v376
        %v378 = vpop.f32.mrf.mxu0
        %v379 = vadd.f32 0.0, %v378
        %380 = vmatprep.mubr.f32.mxu0 0.0
        %381 = vmatmul.mubr.f32.gmra.mxu0 %v227
        %v382 = vpop.f32.mrf.mxu0
        %v383 = vadd.f32 0.0, %v382
        %v384 = vpop.f32.mrf.mxu0
        %v385 = vadd.f32 0.0, %v384
        %386 = vmatprep.mubr.f32.mxu0 0.0
        %387 = vmatmul.mubr.f32.gmra.mxu0 %v228
        %v388 = vpop.f32.mrf.mxu0
        %v389 = vadd.f32 0.0, %v388
        %v390 = vpop.f32.mrf.mxu0
        %v391 = vadd.f32 0.0, %v390
        %392 = vmatprep.mubr.f32.mxu0 0.0
        %393 = vmatmul.mubr.f32.gmra.mxu0 %v229
        %v394 = vpop.f32.mrf.mxu0
        %v395 = vadd.f32 0.0, %v394
        %v396 = vpop.f32.mrf.mxu0
        %v397 = vadd.f32 0.0, %v396
        %398 = vmatprep.mubr.f32.mxu0 0.0
        %399 = vmatmul.mubr.f32.gmra.mxu0 %v230
        %v400 = vpop.f32.mrf.mxu0
        %v401 = vadd.f32 0.0, %v400
        %v402 = vpop.f32.mrf.mxu0
        %v403 = vadd.f32 0.0, %v402
        %404 = vmatprep.mubr.f32.mxu0 0.0
        %405 = vmatmul.mubr.f32.gmra.mxu0 %v231
        %v406 = vpop.f32.mrf.mxu0
        %v407 = vadd.f32 0.0, %v406
        %v408 = vpop.f32.mrf.mxu0
        %v409 = vadd.f32 0.0, %v408
        %410 = vmatprep.mubr.f32.mxu0 0.0
        %411 = vmatmul.mubr.f32.gmra.mxu0 %v232
        %v412 = vpop.f32.mrf.mxu0
        %v413 = vadd.f32 0.0, %v412
        %v414 = vpop.f32.mrf.mxu0
        %v415 = vadd.f32 0.0, %v414
        %416 = vmatprep.mubr.f32.mxu0 0.0
        %417 = vmatmul.mubr.f32.gmra.mxu0 %v233
        %v418 = vpop.f32.mrf.mxu0
        %v419 = vadd.f32 0.0, %v418
        %v420 = vpop.f32.mrf.mxu0
        %v421 = vadd.f32 0.0, %v420
        %422 = vmatprep.mubr.f32.mxu0 0.0
        %423 = vmatmul.mubr.f32.gmra.mxu0 %v234
        %v424 = vpop.f32.mrf.mxu0
        %v425 = vadd.f32 0.0, %v424
        %v426 = vpop.f32.mrf.mxu0
        %v427 = vadd.f32 0.0, %v426
        %428 = vmatprep.mubr.f32.mxu0 0.0
        %429 = vmatmul.mubr.f32.gmra.mxu0 %v235
        %v430 = vpop.f32.mrf.mxu0
        %v431 = vadd.f32 0.0, %v430
        %v432 = vpop.f32.mrf.mxu0
        %v433 = vadd.f32 0.0, %v432
        %434 = vmatprep.mubr.f32.mxu0 0.0
        %435 = vmatmul.mubr.f32.gmra.mxu0 %v236
        %v436 = vpop.f32.mrf.mxu0
        %v437 = vadd.f32 0.0, %v436
        %v438 = vpop.f32.mrf.mxu0
        %v439 = vadd.f32 0.0, %v438
        %440 = vmatprep.mubr.f32.mxu0 0.0
        %441 = vmatmul.mubr.f32.gmra.mxu0 %v237
        %v442 = vpop.f32.mrf.mxu0
        %v443 = vadd.f32 0.0, %v442
        %v444 = vpop.f32.mrf.mxu0
        %v445 = vadd.f32 0.0, %v444
        %446 = vdwg.mxu0
        %447 = vmatprep.subr.mxu0 0.0
        %448 = vmatpush1.msra.mxu0 %v285
        %449 = vmatprep.subr.mxu0 0.0
        %450 = vmatpush1.msra.mxu0 %v282
        %451 = vmatprep.subr.mxu0 0.0
        %452 = vmatpush1.msra.mxu0 %v279
        %453 = vmatprep.subr.mxu0 0.0
        %454 = vmatpush1.msra.mxu0 %v276
        %455 = vmatprep.subr.mxu0 0.0
        %456 = vmatpush1.msra.mxu0 %v273
        %457 = vmatprep.subr.mxu0 0.0
        %458 = vmatpush1.msra.mxu0 %v270
        %459 = vmatprep.subr.mxu0 0.0
        %460 = vmatpush1.msra.mxu0 %v267
        %461 = vmatprep.subr.mxu0 0.0
        %462 = vmatpush1.msra.mxu0 %v264
        %463 = vmatprep.subr.mxu0 0.0
        %464 = vmatpush1.msra.mxu0 %v261
        %465 = vmatprep.subr.mxu0 0.0
        %466 = vmatpush1.msra.mxu0 %v258
        %467 = vmatprep.subr.mxu0 0.0
        %468 = vmatpush1.msra.mxu0 %v255
        %469 = vmatprep.subr.mxu0 0.0
        %470 = vmatpush1.msra.mxu0 %v252
        %471 = vmatprep.subr.mxu0 0.0
        %472 = vmatpush1.msra.mxu0 %v249
        %473 = vmatprep.subr.mxu0 0.0
        %474 = vmatpush1.msra.mxu0 %v246
        %475 = vmatprep.subr.mxu0 0.0
        %476 = vmatpush1.msra.mxu0 %v243
        %477 = vmatprep.subr.mxu0 0.0
        %478 = vmatpush1.msra.mxu0 %v240
        %479 = vmatprep.subr.mxu0 0.0
        %480 = vmatpush2.msra.mxu0 0.0
        %481 = vmatprep.subr.mxu0 0.0
        %482 = vmatpush2.msra.mxu0 0.0
        %483 = vmatprep.subr.mxu0 0.0
        %484 = vmatpush2.msra.mxu0 0.0
        %485 = vmatprep.subr.mxu0 0.0
        %486 = vmatpush2.msra.mxu0 0.0
        %487 = vmatprep.subr.mxu0 0.0
        %488 = vmatpush2.msra.mxu0 0.0
        %489 = vmatprep.subr.mxu0 0.0
        %490 = vmatpush2.msra.mxu0 0.0
        %491 = vmatprep.subr.mxu0 0.0
        %492 = vmatpush2.msra.mxu0 0.0
        %493 = vmatprep.subr.mxu0 0.0
        %494 = vmatpush2.msra.mxu0 0.0
        %495 = vmatprep.subr.mxu0 0.0
        %496 = vmatpush2.msra.mxu0 0.0
        %497 = vmatprep.subr.mxu0 0.0
        %498 = vmatpush2.msra.mxu0 0.0
        %499 = vmatprep.subr.mxu0 0.0
        %500 = vmatpush2.msra.mxu0 0.0
        %501 = vmatprep.subr.mxu0 0.0
        %502 = vmatpush2.msra.mxu0 0.0
        %503 = vmatprep.subr.mxu0 0.0
        %504 = vmatpush2.msra.mxu0 0.0
        %505 = vmatprep.subr.mxu0 0.0
        %506 = vmatpush2.msra.mxu0 0.0
        %507 = vmatprep.subr.mxu0 0.0
        %508 = vmatpush2.msra.mxu0 0.0
        %509 = vmatprep.subr.mxu0 0.0
        %510 = vmatpush2.msra.mxu0 0.0
        %511 = vmatprep.mubr.f32.mxu0 0.0
        %512 = vmatmul.mubr.f32.gmra.mxu0 %v222
        %v513 = vpop.f32.mrf.mxu0
        %v514 = vadd.f32 0.0, %v513
        %v515 = vpop.f32.mrf.mxu0
        %516 = vmatprep.mubr.f32.mxu0 0.0
        %517 = vmatmul.mubr.f32.gmra.mxu0 %v223
        %v518 = vpop.f32.mrf.mxu0
        %v519 = vadd.f32 0.0, %v518
        %v520 = vpop.f32.mrf.mxu0
        %521 = vmatprep.mubr.f32.mxu0 0.0
        %522 = vmatmul.mubr.f32.gmra.mxu0 %v224
        %v523 = vpop.f32.mrf.mxu0
        %v524 = vadd.f32 0.0, %v523
        %v525 = vpop.f32.mrf.mxu0
        %526 = vmatprep.mubr.f32.mxu0 0.0
        %527 = vmatmul.mubr.f32.gmra.mxu0 %v225
        %v528 = vpop.f32.mrf.mxu0
        %v529 = vadd.f32 0.0, %v528
        %v530 = vpop.f32.mrf.mxu0
        %531 = vmatprep.mubr.f32.mxu0 0.0
        %532 = vmatmul.mubr.f32.gmra.mxu0 %v226
        %v533 = vpop.f32.mrf.mxu0
        %v534 = vadd.f32 0.0, %v533
        %v535 = vpop.f32.mrf.mxu0
        %536 = vmatprep.mubr.f32.mxu0 0.0
        %537 = vmatmul.mubr.f32.gmra.mxu0 %v227
        %v538 = vpop.f32.mrf.mxu0
        %v539 = vadd.f32 0.0, %v538
        %v540 = vpop.f32.mrf.mxu0
        %541 = vmatprep.mubr.f32.mxu0 0.0
        %542 = vmatmul.mubr.f32.gmra.mxu0 %v228
        %v543 = vpop.f32.mrf.mxu0
        %v544 = vadd.f32 0.0, %v543
        %v545 = vpop.f32.mrf.mxu0
        %546 = vmatprep.mubr.f32.mxu0 0.0
        %547 = vmatmul.mubr.f32.gmra.mxu0 %v229
        %v548 = vpop.f32.mrf.mxu0
        %v549 = vadd.f32 0.0, %v548
        %v550 = vpop.f32.mrf.mxu0
        %551 = vmatprep.mubr.f32.mxu0 0.0
        %552 = vmatmul.mubr.f32.gmra.mxu0 %v230
        %v553 = vpop.f32.mrf.mxu0
        %v554 = vadd.f32 0.0, %v553
        %v555 = vpop.f32.mrf.mxu0
        %556 = vmatprep.mubr.f32.mxu0 0.0
        %557 = vmatmul.mubr.f32.gmra.mxu0 %v231
        %v558 = vpop.f32.mrf.mxu0
        %v559 = vadd.f32 0.0, %v558
        %v560 = vpop.f32.mrf.mxu0
        %561 = vmatprep.mubr.f32.mxu0 0.0
        %562 = vmatmul.mubr.f32.gmra.mxu0 %v232
        %v563 = vpop.f32.mrf.mxu0
        %v564 = vadd.f32 0.0, %v563
        %v565 = vpop.f32.mrf.mxu0
        %566 = vmatprep.mubr.f32.mxu0 0.0
        %567 = vmatmul.mubr.f32.gmra.mxu0 %v233
        %v568 = vpop.f32.mrf.mxu0
        %v569 = vadd.f32 0.0, %v568
        %v570 = vpop.f32.mrf.mxu0
        %571 = vmatprep.mubr.f32.mxu0 0.0
        %572 = vmatmul.mubr.f32.gmra.mxu0 %v234
        %v573 = vpop.f32.mrf.mxu0
        %v574 = vadd.f32 0.0, %v573
        %v575 = vpop.f32.mrf.mxu0
        %576 = vmatprep.mubr.f32.mxu0 0.0
        %577 = vmatmul.mubr.f32.gmra.mxu0 %v235
        %v578 = vpop.f32.mrf.mxu0
        %v579 = vadd.f32 0.0, %v578
        %v580 = vpop.f32.mrf.mxu0
        %581 = vmatprep.mubr.f32.mxu0 0.0
        %582 = vmatmul.mubr.f32.gmra.mxu0 %v236
        %v583 = vpop.f32.mrf.mxu0
        %v584 = vadd.f32 0.0, %v583
        %v585 = vpop.f32.mrf.mxu0
        %586 = vmatprep.mubr.f32.mxu0 0.0
        %587 = vmatmul.mubr.f32.gmra.mxu0 %v237
        %v588 = vpop.f32.mrf.mxu0
        %v589 = vadd.f32 0.0, %v588
        %v590 = vpop.f32.mrf.mxu0
        %591 = vdwg.mxu0
        %592 = vst [vmem:[#allocation2] sm:$0xff] %v353
        %593 = vst [vmem:[#allocation2 + $0x8] sm:$0xff] %v359
        %594 = vst [vmem:[#allocation2 + $0x10] sm:$0xff] %v365
        %595 = vst [vmem:[#allocation2 + $0x18] sm:$0xff] %v371
        %596 = vst [vmem:[#allocation2 + $0x20] sm:$0xff] %v377
        %597 = vst [vmem:[#allocation2 + $0x28] sm:$0xff] %v383
        %598 = vst [vmem:[#allocation2 + $0x30] sm:$0xff] %v389
        %599 = vst [vmem:[#allocation2 + $0x38] sm:$0xff] %v395
        %600 = vst [vmem:[#allocation2 + $0x40] sm:$0xff] %v401
        %601 = vst [vmem:[#allocation2 + $0x48] sm:$0xff] %v407
        %602 = vst [vmem:[#allocation2 + $0x50] sm:$0xff] %v413
        %603 = vst [vmem:[#allocation2 + $0x58] sm:$0xff] %v419
        %604 = vst [vmem:[#allocation2 + $0x60] sm:$0xff] %v425
        %605 = vst [vmem:[#allocation2 + $0x68] sm:$0xff] %v431
        %606 = vst [vmem:[#allocation2 + $0x70] sm:$0xff] %v437
        %607 = vst [vmem:[#allocation2 + $0x78] sm:$0xff] %v443
        %608 = vst [vmem:[#allocation3] sm:$0xff] %v355
        %609 = vst [vmem:[#allocation3 + $0x8] sm:$0xff] %v361
        %610 = vst [vmem:[#allocation3 + $0x10] sm:$0xff] %v367
        %611 = vst [vmem:[#allocation3 + $0x18] sm:$0xff] %v373
        %612 = vst [vmem:[#allocation3 + $0x20] sm:$0xff] %v379
        %613 = vst [vmem:[#allocation3 + $0x28] sm:$0xff] %v385
        %614 = vst [vmem:[#allocation3 + $0x30] sm:$0xff] %v391
        %615 = vst [vmem:[#allocation3 + $0x38] sm:$0xff] %v397
        %616 = vst [vmem:[#allocation3 + $0x40] sm:$0xff] %v403
        %617 = vst [vmem:[#allocation3 + $0x48] sm:$0xff] %v409
        %618 = vst [vmem:[#allocation3 + $0x50] sm:$0xff] %v415
        %619 = vst [vmem:[#allocation3 + $0x58] sm:$0xff] %v421
        %620 = vst [vmem:[#allocation3 + $0x60] sm:$0xff] %v427
        %621 = vst [vmem:[#allocation3 + $0x68] sm:$0xff] %v433
        %622 = vst [vmem:[#allocation3 + $0x70] sm:$0xff] %v439
        %623 = vst [vmem:[#allocation3 + $0x78] sm:$0xff] %v445
        %624 = vst [vmem:[#allocation4] sm:$0xff] %v514
        %625 = vst [vmem:[#allocation4 + $0x8] sm:$0xff] %v519
        %626 = vst [vmem:[#allocation4 + $0x10] sm:$0xff] %v524
        %627 = vst [vmem:[#allocation4 + $0x18] sm:$0xff] %v529
        %628 = vst [vmem:[#allocation4 + $0x20] sm:$0xff] %v534
        %629 = vst [vmem:[#allocation4 + $0x28] sm:$0xff] %v539
        %630 = vst [vmem:[#allocation4 + $0x30] sm:$0xff] %v544
        %631 = vst [vmem:[#allocation4 + $0x38] sm:$0xff] %v549
        %632 = vst [vmem:[#allocation4 + $0x40] sm:$0xff] %v554
        %633 = vst [vmem:[#allocation4 + $0x48] sm:$0xff] %v559
        %634 = vst [vmem:[#allocation4 + $0x50] sm:$0xff] %v564
        %635 = vst [vmem:[#allocation4 + $0x58] sm:$0xff] %v569
        %636 = vst [vmem:[#allocation4 + $0x60] sm:$0xff] %v574
        %637 = vst [vmem:[#allocation4 + $0x68] sm:$0xff] %v579
        %638 = vst [vmem:[#allocation4 + $0x70] sm:$0xff] %v584
        %639 = vst [vmem:[#allocation4 + $0x78] sm:$0xff] %v589
      $region32: #{self_attention.1} parent=27 // pred_fallthru
        _
      %s640 = smul.u32 %s20, 128
      %s641 = scalar_lea.vmem [#allocation2], %s640
      %v642 = vld [vmem:[%s641] sm:$0xff]
      %v643 = vld [vmem:[%s641 + $0x8] sm:$0xff]
      %v644 = vld [vmem:[%s641 + $0x10] sm:$0xff]
      %v645 = vld [vmem:[%s641 + $0x18] sm:$0xff]
      %v646 = vld [vmem:[%s641 + $0x20] sm:$0xff]
      %v647 = vld [vmem:[%s641 + $0x28] sm:$0xff]
      %v648 = vld [vmem:[%s641 + $0x30] sm:$0xff]
      %v649 = vld [vmem:[%s641 + $0x38] sm:$0xff]
      %v650 = vld [vmem:[%s641 + $0x40] sm:$0xff]
      %v651 = vld [vmem:[%s641 + $0x48] sm:$0xff]
      %v652 = vld [vmem:[%s641 + $0x50] sm:$0xff]
      %v653 = vld [vmem:[%s641 + $0x58] sm:$0xff]
      %v654 = vld [vmem:[%s641 + $0x60] sm:$0xff]
      %v655 = vld [vmem:[%s641 + $0x68] sm:$0xff]
      %v656 = vld [vmem:[%s641 + $0x70] sm:$0xff]
      %v657 = vld [vmem:[%s641 + $0x78] sm:$0xff]
      %v658 = vld [vmem:[#allocation3] sm:$0xff]
      %v659 = vld [vmem:[#allocation3 + $0x8] sm:$0xff]
      %v660 = vld [vmem:[#allocation3 + $0x10] sm:$0xff]
      %v661 = vld [vmem:[#allocation3 + $0x18] sm:$0xff]
      %v662 = vld [vmem:[#allocation3 + $0x20] sm:$0xff]
      %v663 = vld [vmem:[#allocation3 + $0x28] sm:$0xff]
      %v664 = vld [vmem:[#allocation3 + $0x30] sm:$0xff]
      %v665 = vld [vmem:[#allocation3 + $0x38] sm:$0xff]
      %v666 = vld [vmem:[#allocation3 + $0x40] sm:$0xff]
      %v667 = vld [vmem:[#allocation3 + $0x48] sm:$0xff]
      %v668 = vld [vmem:[#allocation3 + $0x50] sm:$0xff]
      %v669 = vld [vmem:[#allocation3 + $0x58] sm:$0xff]
      %v670 = vld [vmem:[#allocation3 + $0x60] sm:$0xff]
      %v671 = vld [vmem:[#allocation3 + $0x68] sm:$0xff]
      %v672 = vld [vmem:[#allocation3 + $0x70] sm:$0xff]
      %v673 = vld [vmem:[#allocation3 + $0x78] sm:$0xff]
      %674 = vmatprep.subr.mxu0 0.0
      %675 = vmatpush1.xpose.msra.mxu0 %v673
      %676 = vmatprep.subr.mxu0 0.0
      %677 = vmatpush1.xpose.msra.mxu0 %v672
      %678 = vmatprep.subr.mxu0 0.0
      %679 = vmatpush1.xpose.msra.mxu0 %v671
      %680 = vmatprep.subr.mxu0 0.0
      %681 = vmatpush1.xpose.msra.mxu0 %v670
      %682 = vmatprep.subr.mxu0 0.0
      %683 = vmatpush1.xpose.msra.mxu0 %v669
      %684 = vmatprep.subr.mxu0 0.0
      %685 = vmatpush1.xpose.msra.mxu0 %v668
      %686 = vmatprep.subr.mxu0 0.0
      %687 = vmatpush1.xpose.msra.mxu0 %v667
      %688 = vmatprep.subr.mxu0 0.0
      %689 = vmatpush1.xpose.msra.mxu0 %v666
      %690 = vmatprep.subr.mxu0 0.0
      %691 = vmatpush1.xpose.msra.mxu0 %v665
      %692 = vmatprep.subr.mxu0 0.0
      %693 = vmatpush1.xpose.msra.mxu0 %v664
      %694 = vmatprep.subr.mxu0 0.0
      %695 = vmatpush1.xpose.msra.mxu0 %v663
      %696 = vmatprep.subr.mxu0 0.0
      %697 = vmatpush1.xpose.msra.mxu0 %v662
      %698 = vmatprep.subr.mxu0 0.0
      %699 = vmatpush1.xpose.msra.mxu0 %v661
      %700 = vmatprep.subr.mxu0 0.0
      %701 = vmatpush1.xpose.msra.mxu0 %v660
      %702 = vmatprep.subr.mxu0 0.0
      %703 = vmatpush1.xpose.msra.mxu0 %v659
      %704 = vmatprep.subr.mxu0 0.0
      %705 = vmatpush1.xpose.msra.mxu0 %v658
      %706 = vmatprep.subr.mxu0 0.0
      %707 = vmatpush2.xpose.msra.mxu0 0.0
      %708 = vmatprep.subr.mxu0 0.0
      %709 = vmatpush2.xpose.msra.mxu0 0.0
      %710 = vmatprep.subr.mxu0 0.0
      %711 = vmatpush2.xpose.msra.mxu0 0.0
      %712 = vmatprep.subr.mxu0 0.0
      %713 = vmatpush2.xpose.msra.mxu0 0.0
      %714 = vmatprep.subr.mxu0 0.0
      %715 = vmatpush2.xpose.msra.mxu0 0.0
      %716 = vmatprep.subr.mxu0 0.0
      %717 = vmatpush2.xpose.msra.mxu0 0.0
      %718 = vmatprep.subr.mxu0 0.0
      %719 = vmatpush2.xpose.msra.mxu0 0.0
      %720 = vmatprep.subr.mxu0 0.0
      %721 = vmatpush2.xpose.msra.mxu0 0.0
      %722 = vmatprep.subr.mxu0 0.0
      %723 = vmatpush2.xpose.msra.mxu0 0.0
      %724 = vmatprep.subr.mxu0 0.0
      %725 = vmatpush2.xpose.msra.mxu0 0.0
      %726 = vmatprep.subr.mxu0 0.0
      %727 = vmatpush2.xpose.msra.mxu0 0.0
      %728 = vmatprep.subr.mxu0 0.0
      %729 = vmatpush2.xpose.msra.mxu0 0.0
      %730 = vmatprep.subr.mxu0 0.0
      %731 = vmatpush2.xpose.msra.mxu0 0.0
      %732 = vmatprep.subr.mxu0 0.0
      %733 = vmatpush2.xpose.msra.mxu0 0.0
      %734 = vmatprep.subr.mxu0 0.0
      %735 = vmatpush2.xpose.msra.mxu0 0.0
      %736 = vmatprep.subr.mxu0 0.0
      %737 = vmatpush2.xpose.msra.mxu0 0.0
      %738 = vmatprep.mubr.f32.mxu0 0.0
      %739 = vmatmul.mubr.f32.gmra.mxu0 %v642
      %v740 = vpop.f32.mrf.mxu0
      %v741 = vadd.f32 0.0, %v740
      %v742 = vpop.f32.mrf.mxu0
      %743 = vmatprep.mubr.f32.mxu0 0.0
      %744 = vmatmul.mubr.f32.gmra.mxu0 %v643
      %v745 = vpop.f32.mrf.mxu0
      %v746 = vadd.f32 0.0, %v745
      %v747 = vpop.f32.mrf.mxu0
      %748 = vmatprep.mubr.f32.mxu0 0.0
      %749 = vmatmul.mubr.f32.gmra.mxu0 %v644
      %v750 = vpop.f32.mrf.mxu0
      %v751 = vadd.f32 0.0, %v750
      %v752 = vpop.f32.mrf.mxu0
      %753 = vmatprep.mubr.f32.mxu0 0.0
      %754 = vmatmul.mubr.f32.gmra.mxu0 %v645
      %v755 = vpop.f32.mrf.mxu0
      %v756 = vadd.f32 0.0, %v755
      %v757 = vpop.f32.mrf.mxu0
      %758 = vmatprep.mubr.f32.mxu0 0.0
      %759 = vmatmul.mubr.f32.gmra.mxu0 %v646
      %v760 = vpop.f32.mrf.mxu0
      %v761 = vadd.f32 0.0, %v760
      %v762 = vpop.f32.mrf.mxu0
      %763 = vmatprep.mubr.f32.mxu0 0.0
      %764 = vmatmul.mubr.f32.gmra.mxu0 %v647
      %v765 = vpop.f32.mrf.mxu0
      %v766 = vadd.f32 0.0, %v765
      %v767 = vpop.f32.mrf.mxu0
      %768 = vmatprep.mubr.f32.mxu0 0.0
      %769 = vmatmul.mubr.f32.gmra.mxu0 %v648
      %v770 = vpop.f32.mrf.mxu0
      %v771 = vadd.f32 0.0, %v770
      %v772 = vpop.f32.mrf.mxu0
      %773 = vmatprep.mubr.f32.mxu0 0.0
      %774 = vmatmul.mubr.f32.gmra.mxu0 %v649
      %v775 = vpop.f32.mrf.mxu0
      %v776 = vadd.f32 0.0, %v775
      %v777 = vpop.f32.mrf.mxu0
      %778 = vmatprep.mubr.f32.mxu0 0.0
      %779 = vmatmul.mubr.f32.gmra.mxu0 %v650
      %v780 = vpop.f32.mrf.mxu0
      %v781 = vadd.f32 0.0, %v780
      %v782 = vpop.f32.mrf.mxu0
      %783 = vmatprep.mubr.f32.mxu0 0.0
      %784 = vmatmul.mubr.f32.gmra.mxu0 %v651
      %v785 = vpop.f32.mrf.mxu0
      %v786 = vadd.f32 0.0, %v785
      %v787 = vpop.f32.mrf.mxu0
      %788 = vmatprep.mubr.f32.mxu0 0.0
      %789 = vmatmul.mubr.f32.gmra.mxu0 %v652
      %v790 = vpop.f32.mrf.mxu0
      %v791 = vadd.f32 0.0, %v790
      %v792 = vpop.f32.mrf.mxu0
      %793 = vmatprep.mubr.f32.mxu0 0.0
      %794 = vmatmul.mubr.f32.gmra.mxu0 %v653
      %v795 = vpop.f32.mrf.mxu0
      %v796 = vadd.f32 0.0, %v795
      %v797 = vpop.f32.mrf.mxu0
      %798 = vmatprep.mubr.f32.mxu0 0.0
      %799 = vmatmul.mubr.f32.gmra.mxu0 %v654
      %v800 = vpop.f32.mrf.mxu0
      %v801 = vadd.f32 0.0, %v800
      %v802 = vpop.f32.mrf.mxu0
      %803 = vmatprep.mubr.f32.mxu0 0.0
      %804 = vmatmul.mubr.f32.gmra.mxu0 %v655
      %v805 = vpop.f32.mrf.mxu0
      %v806 = vadd.f32 0.0, %v805
      %v807 = vpop.f32.mrf.mxu0
      %808 = vmatprep.mubr.f32.mxu0 0.0
      %809 = vmatmul.mubr.f32.gmra.mxu0 %v656
      %v810 = vpop.f32.mrf.mxu0
      %v811 = vadd.f32 0.0, %v810
      %v812 = vpop.f32.mrf.mxu0
      %813 = vmatprep.mubr.f32.mxu0 0.0
      %814 = vmatmul.mubr.f32.gmra.mxu0 %v657
      %v815 = vpop.f32.mrf.mxu0
      %v816 = vadd.f32 0.0, %v815
      %v817 = vpop.f32.mrf.mxu0
      %818 = vdwg.mxu0
      %v819 = vlaneseq
      %v820 = vand.u32 %v819, 127
      %vm821 = vcmp.lt.s32.totalorder %v820, 8
      %v822 = vsel %vm821, 1, 0
      %vm823 = vcmp.eq.s32.totalorder %v822, 1
      %v824 = vsel %vm823, %v741, -inf
      %v825 = vsel %vm823, %v746, -inf
      %v826 = vsel %vm823, %v751, -inf
      %v827 = vsel %vm823, %v756, -inf
      %v828 = vsel %vm823, %v761, -inf
      %v829 = vsel %vm823, %v766, -inf
      %v830 = vsel %vm823, %v771, -inf
      %v831 = vsel %vm823, %v776, -inf
      %v832 = vsel %vm823, %v781, -inf
      %v833 = vsel %vm823, %v786, -inf
      %v834 = vsel %vm823, %v791, -inf
      %v835 = vsel %vm823, %v796, -inf
      %v836 = vsel %vm823, %v801, -inf
      %v837 = vsel %vm823, %v806, -inf
      %v838 = vsel %vm823, %v811, -inf
      %v839 = vsel %vm823, %v816, -inf
      %840 = vmax.xlane.f32.xlu0 %v824
      %v841 = vpop.xlane.xlu0 %840
      %842 = vmax.xlane.f32.xlu0 %v825
      %v843 = vpop.xlane.xlu0 %842
      %844 = vmax.xlane.f32.xlu0 %v826
      %v845 = vpop.xlane.xlu0 %844
      %846 = vmax.xlane.f32.xlu0 %v827
      %v847 = vpop.xlane.xlu0 %846
      %848 = vmax.xlane.f32.xlu0 %v828
      %v849 = vpop.xlane.xlu0 %848
      %850 = vmax.xlane.f32.xlu0 %v829
      %v851 = vpop.xlane.xlu0 %850
      %852 = vmax.xlane.f32.xlu0 %v830
      %v853 = vpop.xlane.xlu0 %852
      %854 = vmax.xlane.f32.xlu0 %v831
      %v855 = vpop.xlane.xlu0 %854
      %856 = vmax.xlane.f32.xlu0 %v832
      %v857 = vpop.xlane.xlu0 %856
      %858 = vmax.xlane.f32.xlu0 %v833
      %v859 = vpop.xlane.xlu0 %858
      %860 = vmax.xlane.f32.xlu0 %v834
      %v861 = vpop.xlane.xlu0 %860
      %862 = vmax.xlane.f32.xlu0 %v835
      %v863 = vpop.xlane.xlu0 %862
      %864 = vmax.xlane.f32.xlu0 %v836
      %v865 = vpop.xlane.xlu0 %864
      %866 = vmax.xlane.f32.xlu0 %v837
      %v867 = vpop.xlane.xlu0 %866
      %868 = vmax.xlane.f32.xlu0 %v838
      %v869 = vpop.xlane.xlu0 %868
      %870 = vmax.xlane.f32.xlu0 %v839
      %v871 = vpop.xlane.xlu0 %870
      %v872 = vsub.f32 %v824, %v841
      %v873 = vsub.f32 %v825, %v843
      %v874 = vsub.f32 %v826, %v845
      %v875 = vsub.f32 %v827, %v847
      %v876 = vsub.f32 %v828, %v849
      %v877 = vsub.f32 %v829, %v851
      %v878 = vsub.f32 %v830, %v853
      %v879 = vsub.f32 %v831, %v855
      %v880 = vsub.f32 %v832, %v857
      %v881 = vsub.f32 %v833, %v859
      %v882 = vsub.f32 %v834, %v861
      %v883 = vsub.f32 %v835, %v863
      %v884 = vsub.f32 %v836, %v865
      %v885 = vsub.f32 %v837, %v867
      %v886 = vsub.f32 %v838, %v869
      %v887 = vsub.f32 %v839, %v871
      %v888 = vmul.f32 %v872, 1.442695
      %v889 = vpow.pop %v888
      %v890 = vmul.f32 %v873, 1.442695
      %v891 = vpow.pop %v890
      %v892 = vmul.f32 %v874, 1.442695
      %v893 = vpow.pop %v892
      %v894 = vmul.f32 %v875, 1.442695
      %v895 = vpow.pop %v894
      %v896 = vmul.f32 %v876, 1.442695
      %v897 = vpow.pop %v896
      %v898 = vmul.f32 %v877, 1.442695
      %v899 = vpow.pop %v898
      %v900 = vmul.f32 %v878, 1.442695
      %v901 = vpow.pop %v900
      %v902 = vmul.f32 %v879, 1.442695
      %v903 = vpow.pop %v902
      %v904 = vmul.f32 %v880, 1.442695
      %v905 = vpow.pop %v904
      %v906 = vmul.f32 %v881, 1.442695
      %v907 = vpow.pop %v906
      %v908 = vmul.f32 %v882, 1.442695
      %v909 = vpow.pop %v908
      %v910 = vmul.f32 %v883, 1.442695
      %v911 = vpow.pop %v910
      %v912 = vmul.f32 %v884, 1.442695
      %v913 = vpow.pop %v912
      %v914 = vmul.f32 %v885, 1.442695
      %v915 = vpow.pop %v914
      %v916 = vmul.f32 %v886, 1.442695
      %v917 = vpow.pop %v916
      %v918 = vmul.f32 %v887, 1.442695
      %v919 = vpow.pop %v918
      %920 = vadd.xlane.f32.xlu0 %v889
      %v921 = vpop.xlane.xlu0 %920
      %922 = vadd.xlane.f32.xlu0 %v891
      %v923 = vpop.xlane.xlu0 %922
      %924 = vadd.xlane.f32.xlu0 %v893
      %v925 = vpop.xlane.xlu0 %924
      %926 = vadd.xlane.f32.xlu0 %v895
      %v927 = vpop.xlane.xlu0 %926
      %928 = vadd.xlane.f32.xlu0 %v897
      %v929 = vpop.xlane.xlu0 %928
      %930 = vadd.xlane.f32.xlu0 %v899
      %v931 = vpop.xlane.xlu0 %930
      %932 = vadd.xlane.f32.xlu0 %v901
      %v933 = vpop.xlane.xlu0 %932
      %934 = vadd.xlane.f32.xlu0 %v903
      %v935 = vpop.xlane.xlu0 %934
      %936 = vadd.xlane.f32.xlu0 %v905
      %v937 = vpop.xlane.xlu0 %936
      %938 = vadd.xlane.f32.xlu0 %v907
      %v939 = vpop.xlane.xlu0 %938
      %940 = vadd.xlane.f32.xlu0 %v909
      %v941 = vpop.xlane.xlu0 %940
      %942 = vadd.xlane.f32.xlu0 %v911
      %v943 = vpop.xlane.xlu0 %942
      %944 = vadd.xlane.f32.xlu0 %v913
      %v945 = vpop.xlane.xlu0 %944
      %946 = vadd.xlane.f32.xlu0 %v915
      %v947 = vpop.xlane.xlu0 %946
      %948 = vadd.xlane.f32.xlu0 %v917
      %v949 = vpop.xlane.xlu0 %948
      %950 = vadd.xlane.f32.xlu0 %v919
      %v951 = vpop.xlane.xlu0 %950
      %v952 = vrcp.pop %v921
      %v953 = vrcp.pop %v923
      %v954 = vrcp.pop %v925
      %v955 = vrcp.pop %v927
      %v956 = vrcp.pop %v929
      %v957 = vrcp.pop %v931
      %v958 = vrcp.pop %v933
      %v959 = vrcp.pop %v935
      %v960 = vrcp.pop %v937
      %v961 = vrcp.pop %v939
      %v962 = vrcp.pop %v941
      %v963 = vrcp.pop %v943
      %v964 = vrcp.pop %v945
      %v965 = vrcp.pop %v947
      %v966 = vrcp.pop %v949
      %v967 = vrcp.pop %v951
      %v968 = vmul.f32 %v889, %v952
      %v969 = vmul.f32 %v891, %v953
      %v970 = vmul.f32 %v893, %v954
      %v971 = vmul.f32 %v895, %v955
      %v972 = vmul.f32 %v897, %v956
      %v973 = vmul.f32 %v899, %v957
      %v974 = vmul.f32 %v901, %v958
      %v975 = vmul.f32 %v903, %v959
      %v976 = vmul.f32 %v905, %v960
      %v977 = vmul.f32 %v907, %v961
      %v978 = vmul.f32 %v909, %v962
      %v979 = vmul.f32 %v911, %v963
      %v980 = vmul.f32 %v913, %v964
      %v981 = vmul.f32 %v915, %v965
      %v982 = vmul.f32 %v917, %v966
      %v983 = vmul.f32 %v919, %v967
      %v984 = vld [vmem:[#allocation4] sm:$0xff]
      %v985 = vld [vmem:[#allocation4 + $0x8] sm:$0xff]
      %v986 = vld [vmem:[#allocation4 + $0x10] sm:$0xff]
      %v987 = vld [vmem:[#allocation4 + $0x18] sm:$0xff]
      %v988 = vld [vmem:[#allocation4 + $0x20] sm:$0xff]
      %v989 = vld [vmem:[#allocation4 + $0x28] sm:$0xff]
      %v990 = vld [vmem:[#allocation4 + $0x30] sm:$0xff]
      %v991 = vld [vmem:[#allocation4 + $0x38] sm:$0xff]
      %v992 = vld [vmem:[#allocation4 + $0x40] sm:$0xff]
      %v993 = vld [vmem:[#allocation4 + $0x48] sm:$0xff]
      %v994 = vld [vmem:[#allocation4 + $0x50] sm:$0xff]
      %v995 = vld [vmem:[#allocation4 + $0x58] sm:$0xff]
      %v996 = vld [vmem:[#allocation4 + $0x60] sm:$0xff]
      %v997 = vld [vmem:[#allocation4 + $0x68] sm:$0xff]
      %v998 = vld [vmem:[#allocation4 + $0x70] sm:$0xff]
      %v999 = vld [vmem:[#allocation4 + $0x78] sm:$0xff]
      %1000 = vmatprep.subr.mxu0 0.0
      %1001 = vmatpush1.msra.mxu0 %v999
      %1002 = vmatprep.subr.mxu0 0.0
      %1003 = vmatpush1.msra.mxu0 %v998
      %1004 = vmatprep.subr.mxu0 0.0
      %1005 = vmatpush1.msra.mxu0 %v997
      %1006 = vmatprep.subr.mxu0 0.0
      %1007 = vmatpush1.msra.mxu0 %v996
      %1008 = vmatprep.subr.mxu0 0.0
      %1009 = vmatpush1.msra.mxu0 %v995
      %1010 = vmatprep.subr.mxu0 0.0
      %1011 = vmatpush1.msra.mxu0 %v994
      %1012 = vmatprep.subr.mxu0 0.0
      %1013 = vmatpush1.msra.mxu0 %v993
      %1014 = vmatprep.subr.mxu0 0.0
      %1015 = vmatpush1.msra.mxu0 %v992
      %1016 = vmatprep.subr.mxu0 0.0
      %1017 = vmatpush1.msra.mxu0 %v991
      %1018 = vmatprep.subr.mxu0 0.0
      %1019 = vmatpush1.msra.mxu0 %v990
      %1020 = vmatprep.subr.mxu0 0.0
      %1021 = vmatpush1.msra.mxu0 %v989
      %1022 = vmatprep.subr.mxu0 0.0
      %1023 = vmatpush1.msra.mxu0 %v988
      %1024 = vmatprep.subr.mxu0 0.0
      %1025 = vmatpush1.msra.mxu0 %v987
      %1026 = vmatprep.subr.mxu0 0.0
      %1027 = vmatpush1.msra.mxu0 %v986
      %1028 = vmatprep.subr.mxu0 0.0
      %1029 = vmatpush1.msra.mxu0 %v985
      %1030 = vmatprep.subr.mxu0 0.0
      %1031 = vmatpush1.msra.mxu0 %v984
      %1032 = vmatprep.subr.mxu0 0.0
      %1033 = vmatpush2.msra.mxu0 0.0
      %1034 = vmatprep.subr.mxu0 0.0
      %1035 = vmatpush2.msra.mxu0 0.0
      %1036 = vmatprep.subr.mxu0 0.0
      %1037 = vmatpush2.msra.mxu0 0.0
      %1038 = vmatprep.subr.mxu0 0.0
      %1039 = vmatpush2.msra.mxu0 0.0
      %1040 = vmatprep.subr.mxu0 0.0
      %1041 = vmatpush2.msra.mxu0 0.0
      %1042 = vmatprep.subr.mxu0 0.0
      %1043 = vmatpush2.msra.mxu0 0.0
      %1044 = vmatprep.subr.mxu0 0.0
      %1045 = vmatpush2.msra.mxu0 0.0
      %1046 = vmatprep.subr.mxu0 0.0
      %1047 = vmatpush2.msra.mxu0 0.0
      %1048 = vmatprep.subr.mxu0 0.0
      %1049 = vmatpush2.msra.mxu0 0.0
      %1050 = vmatprep.subr.mxu0 0.0
      %1051 = vmatpush2.msra.mxu0 0.0
      %1052 = vmatprep.subr.mxu0 0.0
      %1053 = vmatpush2.msra.mxu0 0.0
      %1054 = vmatprep.subr.mxu0 0.0
      %1055 = vmatpush2.msra.mxu0 0.0
      %1056 = vmatprep.subr.mxu0 0.0
      %1057 = vmatpush2.msra.mxu0 0.0
      %1058 = vmatprep.subr.mxu0 0.0
      %1059 = vmatpush2.msra.mxu0 0.0
      %1060 = vmatprep.subr.mxu0 0.0
      %1061 = vmatpush2.msra.mxu0 0.0
      %1062 = vmatprep.subr.mxu0 0.0
      %1063 = vmatpush2.msra.mxu0 0.0
      %1064 = vmatprep.mubr.f32.mxu0 0.0
      %1065 = vmatmul.mubr.f32.gmra.mxu0 %v968
      %v1066 = vpop.f32.mrf.mxu0
      %v1067 = vadd.f32 0.0, %v1066
      %v1068 = vpop.f32.mrf.mxu0
      %1069 = vmatprep.mubr.f32.mxu0 0.0
      %1070 = vmatmul.mubr.f32.gmra.mxu0 %v969
      %v1071 = vpop.f32.mrf.mxu0
      %v1072 = vadd.f32 0.0, %v1071
      %v1073 = vpop.f32.mrf.mxu0
      %1074 = vmatprep.mubr.f32.mxu0 0.0
      %1075 = vmatmul.mubr.f32.gmra.mxu0 %v970
      %v1076 = vpop.f32.mrf.mxu0
      %v1077 = vadd.f32 0.0, %v1076
      %v1078 = vpop.f32.mrf.mxu0
      %1079 = vmatprep.mubr.f32.mxu0 0.0
      %1080 = vmatmul.mubr.f32.gmra.mxu0 %v971
      %v1081 = vpop.f32.mrf.mxu0
      %v1082 = vadd.f32 0.0, %v1081
      %v1083 = vpop.f32.mrf.mxu0
      %1084 = vmatprep.mubr.f32.mxu0 0.0
      %1085 = vmatmul.mubr.f32.gmra.mxu0 %v972
      %v1086 = vpop.f32.mrf.mxu0
      %v1087 = vadd.f32 0.0, %v1086
      %v1088 = vpop.f32.mrf.mxu0
      %1089 = vmatprep.mubr.f32.mxu0 0.0
      %1090 = vmatmul.mubr.f32.gmra.mxu0 %v973
      %v1091 = vpop.f32.mrf.mxu0
      %v1092 = vadd.f32 0.0, %v1091
      %v1093 = vpop.f32.mrf.mxu0
      %1094 = vmatprep.mubr.f32.mxu0 0.0
      %1095 = vmatmul.mubr.f32.gmra.mxu0 %v974
      %v1096 = vpop.f32.mrf.mxu0
      %v1097 = vadd.f32 0.0, %v1096
      %v1098 = vpop.f32.mrf.mxu0
      %1099 = vmatprep.mubr.f32.mxu0 0.0
      %1100 = vmatmul.mubr.f32.gmra.mxu0 %v975
      %v1101 = vpop.f32.mrf.mxu0
      %v1102 = vadd.f32 0.0, %v1101
      %v1103 = vpop.f32.mrf.mxu0
      %1104 = vmatprep.mubr.f32.mxu0 0.0
      %1105 = vmatmul.mubr.f32.gmra.mxu0 %v976
      %v1106 = vpop.f32.mrf.mxu0
      %v1107 = vadd.f32 0.0, %v1106
      %v1108 = vpop.f32.mrf.mxu0
      %1109 = vmatprep.mubr.f32.mxu0 0.0
      %1110 = vmatmul.mubr.f32.gmra.mxu0 %v977
      %v1111 = vpop.f32.mrf.mxu0
      %v1112 = vadd.f32 0.0, %v1111
      %v1113 = vpop.f32.mrf.mxu0
      %1114 = vmatprep.mubr.f32.mxu0 0.0
      %1115 = vmatmul.mubr.f32.gmra.mxu0 %v978
      %v1116 = vpop.f32.mrf.mxu0
      %v1117 = vadd.f32 0.0, %v1116
      %v1118 = vpop.f32.mrf.mxu0
      %1119 = vmatprep.mubr.f32.mxu0 0.0
      %1120 = vmatmul.mubr.f32.gmra.mxu0 %v979
      %v1121 = vpop.f32.mrf.mxu0
      %v1122 = vadd.f32 0.0, %v1121
      %v1123 = vpop.f32.mrf.mxu0
      %1124 = vmatprep.mubr.f32.mxu0 0.0
      %1125 = vmatmul.mubr.f32.gmra.mxu0 %v980
      %v1126 = vpop.f32.mrf.mxu0
      %v1127 = vadd.f32 0.0, %v1126
      %v1128 = vpop.f32.mrf.mxu0
      %1129 = vmatprep.mubr.f32.mxu0 0.0
      %1130 = vmatmul.mubr.f32.gmra.mxu0 %v981
      %v1131 = vpop.f32.mrf.mxu0
      %v1132 = vadd.f32 0.0, %v1131
      %v1133 = vpop.f32.mrf.mxu0
      %1134 = vmatprep.mubr.f32.mxu0 0.0
      %1135 = vmatmul.mubr.f32.gmra.mxu0 %v982
      %v1136 = vpop.f32.mrf.mxu0
      %v1137 = vadd.f32 0.0, %v1136
      %v1138 = vpop.f32.mrf.mxu0
      %1139 = vmatprep.mubr.f32.mxu0 0.0
      %1140 = vmatmul.mubr.f32.gmra.mxu0 %v983
      %v1141 = vpop.f32.mrf.mxu0
      %v1142 = vadd.f32 0.0, %v1141
      %v1143 = vpop.f32.mrf.mxu0
      %1144 = vdwg.mxu0
      %1145 = vst [vmem:[%s206] sm:$0xff] %v1067
      %1146 = vst [vmem:[%s206 + $0x8] sm:$0xff] %v1072
      %1147 = vst [vmem:[%s206 + $0x10] sm:$0xff] %v1077
      %1148 = vst [vmem:[%s206 + $0x18] sm:$0xff] %v1082
      %1149 = vst [vmem:[%s206 + $0x20] sm:$0xff] %v1087
      %1150 = vst [vmem:[%s206 + $0x28] sm:$0xff] %v1092
      %1151 = vst [vmem:[%s206 + $0x30] sm:$0xff] %v1097
      %1152 = vst [vmem:[%s206 + $0x38] sm:$0xff] %v1102
      %1153 = vst [vmem:[%s206 + $0x40] sm:$0xff] %v1107
      %1154 = vst [vmem:[%s206 + $0x48] sm:$0xff] %v1112
      %1155 = vst [vmem:[%s206 + $0x50] sm:$0xff] %v1117
      %1156 = vst [vmem:[%s206 + $0x58] sm:$0xff] %v1122
      %1157 = vst [vmem:[%s206 + $0x60] sm:$0xff] %v1127
      %1158 = vst [vmem:[%s206 + $0x68] sm:$0xff] %v1132
      %1159 = vst [vmem:[%s206 + $0x70] sm:$0xff] %v1137
      %1160 = vst [vmem:[%s206 + $0x78] sm:$0xff] %v1142
      %1161 = vst [vmem:[%s216] sm:$0xff] %v968
      %1162 = vst [vmem:[%s216 + $0x8] sm:$0xff] %v969
      %1163 = vst [vmem:[%s216 + $0x10] sm:$0xff] %v970
      %1164 = vst [vmem:[%s216 + $0x18] sm:$0xff] %v971
      %1165 = vst [vmem:[%s216 + $0x20] sm:$0xff] %v972
      %1166 = vst [vmem:[%s216 + $0x28] sm:$0xff] %v973
      %1167 = vst [vmem:[%s216 + $0x30] sm:$0xff] %v974
      %1168 = vst [vmem:[%s216 + $0x38] sm:$0xff] %v975
      %1169 = vst [vmem:[%s216 + $0x40] sm:$0xff] %v976
      %1170 = vst [vmem:[%s216 + $0x48] sm:$0xff] %v977
      %1171 = vst [vmem:[%s216 + $0x50] sm:$0xff] %v978
      %1172 = vst [vmem:[%s216 + $0x58] sm:$0xff] %v979
      %1173 = vst [vmem:[%s216 + $0x60] sm:$0xff] %v980
      %1174 = vst [vmem:[%s216 + $0x68] sm:$0xff] %v981
      %1175 = vst [vmem:[%s216 + $0x70] sm:$0xff] %v982
      %1176 = vst [vmem:[%s216 + $0x78] sm:$0xff] %v983
      %s1177 = smul.u32 16, %s20
      %p1178 = scmp.lt.s32.totalorder %s19, 3
      %s1179 = scalar_select %p1178, %s19, 3
      %p1180 = scmp.lt.s32.totalorder %s1177, 15
      %s1181 = scalar_select %p1180, %s1177, 15
      %s1182 = smul.addr %s1179, 16
      %s1183 = sadd.s32 %s1181, %s1182
      %s1184 = smul.addr %s1183, 8
      %s1185 = scalar_lea.vmem %s2, %s1184
      %s1186 = smul.u32 16, %s20
      %p1187 = scmp.lt.s32.totalorder %s19, 3
      %s1188 = scalar_select %p1187, %s19, 3
      %p1189 = scmp.lt.s32.totalorder %s1186, 15
      %s1190 = scalar_select %p1189, %s1186, 15
      %s1191 = smul.addr %s1188, 16
      %s1192 = sadd.s32 %s1190, %s1191
      %s1193 = smul.addr %s1192, 8
      %s1194 = scalar_lea.vmem %s3, %s1193
      // Predicated region
      $region33: #{self_attention.1} parent=27 // pred_check
        %p1195 = pneg %p94
      $region34: #{self_attention.1} parent=27 // pred_check_branch
        %1197 = sbr.rel (%p1195) target = $region36
      $region35: #{self_attention.1} parent=27 // pred_region
        %s1198 = smul.u32 16, %s20
      $region36: #{self_attention.1} parent=27 // pred_fallthru
        _
      // Predicated region
      $region37: #{self_attention.1} parent=27 // pred_check
        %p1199 = pneg %p122
      $region38: #{self_attention.1} parent=27 // pred_check_branch
        %1201 = sbr.rel (%p1199) target = $region40
      $region39: #{self_attention.1} parent=27 // pred_region
        %s1202 = smul.u32 16, %s20
      $region40: #{self_attention.1} parent=27 // pred_fallthru
        _
    $region28: #{self_attention.1} parent=5 // pred_fallthru
      _
    %p1203 = scmp.le.s32.totalorder 2, %s10
    // Predicated region
    $region41: #{self_attention.1} parent=5 // pred_check
      %p1204 = pneg %p1203
    $region42: #{self_attention.1} parent=5 // pred_check_branch
      %1206 = sbr.rel (%p1204) target = $region44
    $region43: #{self_attention.1} parent=5 // pred_region
      %s1207 = ssub.s32 %s10, 2
      // Predicated region
      $region45: #{self_attention.1} parent=43 // pred_check
        %p1208 = pneg %p100
      $region46: #{self_attention.1} parent=43 // pred_check_branch
        %1210 = sbr.rel (%p1208) target = $region48
      $region47: #{self_attention.1} parent=43 // pred_region
        %s1211 = smul.u32 16, %s22
        %p1212 = scmp.lt.s32.totalorder %s21, 3
        %s1213 = scalar_select %p1212, %s21, 3
        %p1214 = scmp.lt.s32.totalorder %s1211, 15
        %s1215 = scalar_select %p1214, %s1211, 15
        %s1216 = smul.addr %s1213, 16
        %s1217 = sadd.s32 %s1215, %s1216
        %s1218 = smul.addr %s1217, 8
        %s1219 = scalar_lea.vmem %s2, %s1218
      $region48: #{self_attention.1} parent=43 // pred_fallthru
        _
      // Predicated region
      $region49: #{self_attention.1} parent=43 // pred_check
        %p1220 = pneg %p128
      $region50: #{self_attention.1} parent=43 // pred_check_branch
        %1222 = sbr.rel (%p1220) target = $region52
      $region51: #{self_attention.1} parent=43 // pred_region
        %s1223 = smul.u32 16, %s22
        %p1224 = scmp.lt.s32.totalorder %s21, 3
        %s1225 = scalar_select %p1224, %s21, 3
        %p1226 = scmp.lt.s32.totalorder %s1223, 15
        %s1227 = scalar_select %p1226, %s1223, 15
        %s1228 = smul.addr %s1225, 16
        %s1229 = sadd.s32 %s1227, %s1228
        %s1230 = smul.addr %s1229, 8
        %s1231 = scalar_lea.vmem %s3, %s1230
      $region52: #{self_attention.1} parent=43 // pred_fallthru
        _
    $region44: #{self_attention.1} parent=5 // pred_fallthru
      _
  $region6: #{self_attention.1} parent=0 // loop_footer
    %s14 = sadd.s32 1, %s10
  $region7: #{self_attention.1} parent=0 // loop_footer_branch
    %9 = sbr.rel target = $region3
  $region8: #{self_attention.1} parent=0 // loop_exit
    _

</llo_original>
